<compile_context>
chip_gen: v5e
topology: v5e:2x2
jax: 0.10.0
libtpu: 0.0.40
codegen_flags: <defaults>
</compile_context>

<pallas_src>
import functools

import jax
import jax.numpy as jnp
from jax.experimental import pallas as pl
from jax.experimental.pallas import tpu as pltpu

LANE = 128      # vreg lane width
_EPS = 1e-5     # nn.LayerNorm default eps


def _round_up(x, m):
    return (x + m - 1) // m * m


def _sublane_min(dtype):
    # minimum second-to-last block dim per dtype packing
    return {4: 8, 2: 16, 1: 32}.get(jnp.dtype(dtype).itemsize, 8)


# ----------------------------- fused kernel ---------------------------------

def _masked_layernorm(x, g, b, d_valid):
    """LayerNorm over the last axis; statistics over the first `d_valid` lanes.

    Padded lanes of g/b are zero, so padded output lanes come out exactly 0.
    x is f32; mask is a (1, d_pad) broadcasted row (cheap, no full-tile iota).
    """
    d_pad = x.shape[-1]
    if d_valid == d_pad:
        mean = jnp.mean(x, axis=-1, keepdims=True)
        diff = x - mean
        var = jnp.mean(diff * diff, axis=-1, keepdims=True)
    else:
        lane = jax.lax.broadcasted_iota(jnp.int32, (1, d_pad), 1)
        mask = lane < d_valid                      # (1, d_pad), broadcast over rows
        inv_d = 1.0 / float(d_valid)
        mean = jnp.sum(jnp.where(mask, x, 0.0), axis=-1, keepdims=True) * inv_d
        diff = jnp.where(mask, x - mean, 0.0)
        var = jnp.sum(diff * diff, axis=-1, keepdims=True) * inv_d
    return (x - mean) * jax.lax.rsqrt(var + _EPS) * g.astype(jnp.float32) \
        + b.astype(jnp.float32)


def _fused_mlp_kernel(*refs, n_layers, in_norm, out_norm, d_in, d_out):
    """One row-tile through the entire MLP, everything resident in VMEM."""
    idx = 0
    x_ref = refs[idx]; idx += 1
    if in_norm:
        in_g_ref, in_b_ref = refs[idx], refs[idx + 1]; idx += 2
    wb_refs = []
    for _ in range(n_layers):
        wb_refs.append((refs[idx], refs[idx + 1])); idx += 2
    if out_norm:
        out_g_ref, out_b_ref = refs[idx], refs[idx + 1]; idx += 2
    o_ref = refs[idx]

    cdt = wb_refs[0][0].dtype            # compute dtype for the MXU (bf16)

    y = x_ref[...]
    if in_norm:
        y = _masked_layernorm(y.astype(jnp.float32), in_g_ref[...], in_b_ref[...], d_in)
    y = y.astype(cdt)                    # feed the MXU bf16 operands

    # Zero-padded weight rows/cols and zero-padded bias lanes keep the padded
    # activation lanes exactly 0 throughout the chain.
    for li, (w_ref, b_ref) in enumerate(wb_refs):
        z = jnp.dot(y, w_ref[...], preferred_element_type=jnp.float32)
        z = z + b_ref[...].astype(jnp.float32)
        if li < n_layers - 1:
            y = jnp.maximum(z, 0.0).astype(cdt)   # ReLU on hidden layers, back to bf16
        else:
            y = z                                  # final layer stays f32

    if out_norm:
        y = _masked_layernorm(y, out_g_ref[...], out_b_ref[...], d_out)

    o_ref[...] = y.astype(o_ref.dtype)


# ------------------------------ parameters ----------------------------------

def init_mlp_params(key, dims, out_norm=False, in_norm=False, bias=True,
                    dtype=jnp.float32):
    """PyTorch-style parameters: Linear weight [out, in], bias [out]."""
    params = {"layers": [], "bias": bias, "in_norm": in_norm, "out_norm": out_norm}
    for idx in range(1, len(dims)):
        d_in, d_out = dims[idx - 1], dims[idx]
        key, kw, kb = jax.random.split(key, 3)
        bound = 1.0 / jnp.sqrt(d_in)
        w = jax.random.uniform(kw, (d_out, d_in), dtype, -bound, bound)
        b = (jax.random.uniform(kb, (d_out,), dtype, -bound, bound)
             if bias else jnp.zeros((d_out,), dtype))
        params["layers"].append({"w": w, "b": b})
    if in_norm:
        params["in_ln"] = {"g": jnp.ones((dims[0],), dtype),
                           "b": jnp.zeros((dims[0],), dtype)}
    if out_norm:
        params["out_ln"] = {"g": jnp.ones((dims[-1],), dtype),
                            "b": jnp.zeros((dims[-1],), dtype)}
    return params


def prepare_mlp_params(params, compute_dtype=jnp.bfloat16):
    """One-time: transpose weights to [in, out], zero-pad feature dims to 128,
    and cast weights/biases to the MXU compute dtype (bf16). LN params stay f32."""
    dims = [params["layers"][0]["w"].shape[1]] + [l["w"].shape[0] for l in params["layers"]]
    dims_p = [_round_up(d, LANE) for d in dims]
    prepared = {"dims": dims, "dims_p": dims_p,
                "in_norm": params["in_norm"], "out_norm": params["out_norm"],
                "layers": []}
    for li, lyr in enumerate(params["layers"]):
        d_in, d_out = dims[li], dims[li + 1]
        d_in_p, d_out_p = dims_p[li], dims_p[li + 1]
        w_t = (jnp.zeros((d_in_p, d_out_p), compute_dtype)
               .at[:d_in, :d_out].set(lyr["w"].T.astype(compute_dtype)))
        b = (jnp.zeros((1, d_out_p), compute_dtype)
             .at[0, :d_out].set(lyr["b"].astype(compute_dtype)))
        prepared["layers"].append({"w_t": w_t, "b": b})
    if params["in_norm"]:
        ln = params["in_ln"]
        prepared["in_ln"] = {
            "g": jnp.zeros((1, dims_p[0]), jnp.float32).at[0, :dims[0]].set(ln["g"]),
            "b": jnp.zeros((1, dims_p[0]), jnp.float32).at[0, :dims[0]].set(ln["b"]),
        }
    if params["out_norm"]:
        ln = params["out_ln"]
        prepared["out_ln"] = {
            "g": jnp.zeros((1, dims_p[-1]), jnp.float32).at[0, :dims[-1]].set(ln["g"]),
            "b": jnp.zeros((1, dims_p[-1]), jnp.float32).at[0, :dims[-1]].set(ln["b"]),
        }
    return prepared


# ------------------------------- wrapper -------------------------------------

def mlp_forward(prepared, x, *, row_tile=None):
    """Single fused pallas_call; grid only over the row (batch) axis."""
    n, d_in = x.shape
    dims, dims_p = prepared["dims"], prepared["dims_p"]
    assert d_in == dims[0], "input feature dim mismatch"
    n_layers = len(prepared["layers"])
    in_norm, out_norm = prepared["in_norm"], prepared["out_norm"]
    d0_p, dl_p = dims_p[0], dims_p[-1]
    d_out = dims[-1]

    sub = _sublane_min(x.dtype)            # dtype-aware sublane minimum (f32:8, bf16:16)
    x_bytes = jnp.dtype(x.dtype).itemsize

    # Hardware-aware VMEM budget (per TensorCore). Fall back to v7x's 64 MiB.
    try:
        vmem_cap = int(pltpu.get_tpu_info().vmem_capacity_bytes)
    except Exception:
        vmem_cap = 64 << 20
    vmem_budget = int(0.85 * vmem_cap)

    if row_tile is None:
        # bigger default row tile on v5e/v6e (128 MiB VMEM), smaller on v7x (64 MiB)
        row_tile = 512 if vmem_cap >= (100 << 20) else 256

    # Resident (single-buffered) parameter bytes.
    param_bytes = 0
    for lyr in prepared["layers"]:
        param_bytes += int(lyr["w_t"].size) * lyr["w_t"].dtype.itemsize
        param_bytes += int(lyr["b"].size) * lyr["b"].dtype.itemsize
    for k in ("in_ln", "out_ln"):
        if k in prepared:
            for a in prepared[k].values():
                param_bytes += int(a.size) * a.dtype.itemsize

    max_wp = max(dims_p)

    def tile_bytes(tm_):
        io = 2 * tm_ * (d0_p + dl_p) * x_bytes       # double-buffered in/out row tiles
        act = 3 * tm_ * max_wp * 4                   # live activation headroom (f32-equiv)
        return io + act

    # Row tile: multiple of `sub`, capped by row_tile, at least 2 grid steps
    # when enough rows exist (v7x megacore), shrunk until it fits the budget.
    tm = min(row_tile, _round_up(n, sub))
    if n >= 2 * sub:
        tm = min(tm, _round_up(pl.cdiv(n, 2), sub))
    while tm > sub and param_bytes + tile_bytes(tm) > vmem_budget:
        tm = max(sub, _round_up(tm // 2, sub))
    # TODO(synk): if param_bytes alone exceeds vmem_budget (huge layers, esp. on
    # v7x), switch to a K/N-tiled per-layer kernel with an f32 VMEM accumulator.

    # Host-side padding only when needed: pad feature lanes to 128, never pad rows
    # (partial last row block is masked by Pallas). Tiny batches (< sub) are the
    # only row-pad case, to keep the single block fully in-bounds.
    x_in = x
    if d0_p != d_in:
        x_in = jnp.pad(x_in, ((0, 0), (0, d0_p - d_in)))
    n_rows = n
    if n_rows < sub:
        x_in = jnp.pad(x_in, ((0, sub - n_rows), (0, 0)))
        n_rows = sub

    grid = (pl.cdiv(n_rows, tm),)

    def _const_spec(shape):
        # Grid-invariant parameter: same block every step, single-buffered.
        return pl.BlockSpec(shape, lambda i: (0, 0), pipeline_mode=pl.Buffered(1))

    inputs = [x_in]
    in_specs = [pl.BlockSpec((tm, d0_p), lambda i: (i, 0))]
    if in_norm:
        inputs += [prepared["in_ln"]["g"], prepared["in_ln"]["b"]]
        in_specs += [_const_spec((1, d0_p)), _const_spec((1, d0_p))]
    for li, lyr in enumerate(prepared["layers"]):
        inputs += [lyr["w_t"], lyr["b"]]
        in_specs += [_const_spec((dims_p[li], dims_p[li + 1])),
                     _const_spec((1, dims_p[li + 1]))]
    if out_norm:
        inputs += [prepared["out_ln"]["g"], prepared["out_ln"]["b"]]
        in_specs += [_const_spec((1, dl_p)), _const_spec((1, dl_p))]

    vmem_est = param_bytes + tile_bytes(tm)
    vmem_limit = int(min(vmem_budget, max(2 * vmem_est + (8 << 20), 32 << 20)))

    kernel = functools.partial(
        _fused_mlp_kernel, n_layers=n_layers, in_norm=in_norm, out_norm=out_norm,
        d_in=dims[0], d_out=d_out)

    out = pl.pallas_call(
        kernel,
        out_shape=jax.ShapeDtypeStruct((n_rows, dl_p), x.dtype),
        grid=grid,
        in_specs=in_specs,
        out_specs=pl.BlockSpec((tm, dl_p), lambda i: (i, 0)),
        compiler_params=pltpu.CompilerParams(
            dimension_semantics=("parallel",),   # shard rows across TCs (v7x megacore)
            vmem_limit_bytes=vmem_limit),
    )(*inputs)

    # Slice only when padding was actually applied.
    if n_rows != n:
        out = out[:n]
    if dl_p != d_out:
        out = out[:, :d_out]
    return out


# ------------------------------- reference -----------------------------------

def mlp_forward_ref(params, x):
    y = x
    if params["in_norm"]:
        ln = params["in_ln"]
        mean = jnp.mean(y, -1, keepdims=True)
        var = jnp.mean((y - mean) ** 2, -1, keepdims=True)
        y = (y - mean) * jax.lax.rsqrt(var + _EPS) * ln["g"] + ln["b"]
    for idx in range(len(params["layers"]) - 1):
        lyr = params["layers"][idx]
        y = jnp.maximum(y @ lyr["w"].T + lyr["b"], 0.0)
    lyr = params["layers"][-1]
    y = y @ lyr["w"].T + lyr["b"]
    if params["out_norm"]:
        ln = params["out_ln"]
        mean = jnp.mean(y, -1, keepdims=True)
        var = jnp.mean((y - mean) ** 2, -1, keepdims=True)
        y = (y - mean) * jax.lax.rsqrt(var + _EPS) * ln["g"] + ln["b"]
    return y


# --------------------------------- main ---------------------------------------

if __name__ == "__main__":
    key = jax.random.PRNGKey(0)
    dims = [32, 64, 64, 16]          # dims[0]=in_features, dims[-1]=out_features
    batch = 8

    kparams, kx = jax.random.split(key)
    params = init_mlp_params(kparams, dims, out_norm=True, in_norm=True, bias=True)
    x = jax.random.normal(kx, (batch, dims[0]), jnp.float32)

    prepared = prepare_mlp_params(params)          # one-time pad + transpose + bf16 cast
    out = jax.block_until_ready(mlp_forward(prepared, x))

    ref = mlp_forward_ref(params, x)               # f32 reference
    assert out.shape == (batch, dims[-1])
    max_diff = float(jnp.max(jnp.abs(out - ref)))
    # bf16 MXU operands with f32 accumulation -> compare with bf16-level tolerance
    assert jnp.allclose(out, ref, atol=1e-1, rtol=1e-1), f"max abs diff: {max_diff}"

    print("KERNEL_OK")
</pallas_src>

<mosaic_0001>
module attributes {stable_mosaic.version = 11 : i64} {
  func.func @_fused_mlp_kernel(%arg0: i32, %arg1: memref<8x128xf32, #tpu.memory_space<vmem>>, %arg2: memref<1x128xf32, #tpu.memory_space<vmem>>, %arg3: memref<1x128xf32, #tpu.memory_space<vmem>>, %arg4: memref<128x128xbf16, #tpu.memory_space<vmem>>, %arg5: memref<1x128xbf16, #tpu.memory_space<vmem>>, %arg6: memref<128x128xbf16, #tpu.memory_space<vmem>>, %arg7: memref<1x128xbf16, #tpu.memory_space<vmem>>, %arg8: memref<128x128xbf16, #tpu.memory_space<vmem>>, %arg9: memref<1x128xbf16, #tpu.memory_space<vmem>>, %arg10: memref<1x128xf32, #tpu.memory_space<vmem>>, %arg11: memref<1x128xf32, #tpu.memory_space<vmem>>, %arg12: memref<8x128xf32, #tpu.memory_space<vmem>>) attributes {dimension_semantics = [#tpu.dimension_semantics<parallel>], iteration_bounds = array<i64: 1>, scalar_prefetch = 0 : i64, scratch_operands = 0 : i64, tpu.core_type = #tpu.core_type<tc>, window_params = [{transform_indices = @transform_0, window_bounds = array<i64: 8, 128>}, {pipeline_mode = #tpu.pipeline_mode<synchronous>, transform_indices = @transform_1, window_bounds = array<i64: 1, 128>}, {pipeline_mode = #tpu.pipeline_mode<synchronous>, transform_indices = @transform_2, window_bounds = array<i64: 1, 128>}, {pipeline_mode = #tpu.pipeline_mode<synchronous>, transform_indices = @transform_3, window_bounds = array<i64: 128, 128>}, {pipeline_mode = #tpu.pipeline_mode<synchronous>, transform_indices = @transform_4, window_bounds = array<i64: 1, 128>}, {pipeline_mode = #tpu.pipeline_mode<synchronous>, transform_indices = @transform_5, window_bounds = array<i64: 128, 128>}, {pipeline_mode = #tpu.pipeline_mode<synchronous>, transform_indices = @transform_6, window_bounds = array<i64: 1, 128>}, {pipeline_mode = #tpu.pipeline_mode<synchronous>, transform_indices = @transform_7, window_bounds = array<i64: 128, 128>}, {pipeline_mode = #tpu.pipeline_mode<synchronous>, transform_indices = @transform_8, window_bounds = array<i64: 1, 128>}, {pipeline_mode = #tpu.pipeline_mode<synchronous>, transform_indices = @transform_9, window_bounds = array<i64: 1, 128>}, {pipeline_mode = #tpu.pipeline_mode<synchronous>, transform_indices = @transform_10, window_bounds = array<i64: 1, 128>}, {transform_indices = @transform_11, window_bounds = array<i64: 8, 128>}]} {
    %c0 = arith.constant 0 : index
    %c0_0 = arith.constant 0 : index
    %0 = vector.load %arg1[%c0, %c0_0] : memref<8x128xf32, #tpu.memory_space<vmem>>, vector<8x128xf32>
    %c0_1 = arith.constant 0 : index
    %c0_2 = arith.constant 0 : index
    %1 = vector.load %arg2[%c0_1, %c0_2] : memref<1x128xf32, #tpu.memory_space<vmem>>, vector<1x128xf32>
    %c0_3 = arith.constant 0 : index
    %c0_4 = arith.constant 0 : index
    %2 = vector.load %arg3[%c0_3, %c0_4] : memref<1x128xf32, #tpu.memory_space<vmem>>, vector<1x128xf32>
    %3 = tpu.iota {dimensions = array<i32: 1>} : vector<1x128xi32>
    %c32_i32 = arith.constant 32 : i32
    %4 = vector.broadcast %c32_i32 : i32 to vector<1x128xi32>
    %5 = arith.cmpi slt, %3, %4 : vector<1x128xi32>
    %cst = arith.constant 0.000000e+00 : f32
    %6 = vector.shape_cast %5 : vector<1x128xi1> to vector<1x128xi1>
    %7 = vector.broadcast %6 : vector<1x128xi1> to vector<8x128xi1>
    %8 = vector.broadcast %cst : f32 to vector<8x128xf32>
    %9 = arith.select %7, %0, %8 : vector<8x128xi1>, vector<8x128xf32>
    %cst_5 = arith.constant dense<0.000000e+00> : vector<8xf32>
    %10 = vector.multi_reduction <add>, %9, %cst_5 [1] : vector<8x128xf32> to vector<8xf32>
    %11 = vector.shape_cast %10 : vector<8xf32> to vector<8x1xf32>
    %cst_6 = arith.constant 3.125000e-02 : f32
    %12 = vector.broadcast %cst_6 : f32 to vector<8x1xf32>
    %13 = arith.mulf %11, %12 : vector<8x1xf32>
    %14 = vector.broadcast %13 : vector<8x1xf32> to vector<8x128xf32>
    %15 = arith.subf %0, %14 : vector<8x128xf32>
    %cst_7 = arith.constant 0.000000e+00 : f32
    %16 = vector.shape_cast %5 : vector<1x128xi1> to vector<1x128xi1>
    %17 = vector.broadcast %16 : vector<1x128xi1> to vector<8x128xi1>
    %18 = vector.broadcast %cst_7 : f32 to vector<8x128xf32>
    %19 = arith.select %17, %15, %18 : vector<8x128xi1>, vector<8x128xf32>
    %20 = arith.mulf %19, %19 : vector<8x128xf32>
    %cst_8 = arith.constant dense<0.000000e+00> : vector<8xf32>
    %21 = vector.multi_reduction <add>, %20, %cst_8 [1] : vector<8x128xf32> to vector<8xf32>
    %22 = vector.shape_cast %21 : vector<8xf32> to vector<8x1xf32>
    %cst_9 = arith.constant 3.125000e-02 : f32
    %23 = vector.broadcast %cst_9 : f32 to vector<8x1xf32>
    %24 = arith.mulf %22, %23 : vector<8x1xf32>
    %25 = vector.broadcast %13 : vector<8x1xf32> to vector<8x128xf32>
    %26 = arith.subf %0, %25 : vector<8x128xf32>
    %cst_10 = arith.constant 9.99999974E-6 : f32
    %27 = vector.broadcast %cst_10 : f32 to vector<8x1xf32>
    %28 = arith.addf %24, %27 : vector<8x1xf32>
    %29 = math.rsqrt %28 : vector<8x1xf32>
    %30 = vector.broadcast %29 : vector<8x1xf32> to vector<8x128xf32>
    %31 = arith.mulf %26, %30 : vector<8x128xf32>
    %32 = vector.broadcast %1 : vector<1x128xf32> to vector<8x128xf32>
    %33 = arith.mulf %31, %32 : vector<8x128xf32>
    %34 = vector.broadcast %2 : vector<1x128xf32> to vector<8x128xf32>
    %35 = arith.addf %33, %34 : vector<8x128xf32>
    %36 = arith.truncf %35 : vector<8x128xf32> to vector<8x128xbf16>
    %c0_11 = arith.constant 0 : index
    %c0_12 = arith.constant 0 : index
    %37 = vector.load %arg4[%c0_11, %c0_12] : memref<128x128xbf16, #tpu.memory_space<vmem>>, vector<128x128xbf16>
    %cst_13 = arith.constant dense<0.000000e+00> : vector<8x128xf32>
    %38 = tpu.matmul %36, %37, %cst_13 {dimension_numbers = #tpu.dot_dimension_numbers<[1], [0], [0], [1], [0, 0, 1, 1], [], []>} : vector<8x128xbf16>, vector<128x128xbf16>, vector<8x128xf32> -> vector<8x128xf32>
    %c0_14 = arith.constant 0 : index
    %c0_15 = arith.constant 0 : index
    %39 = vector.load %arg5[%c0_14, %c0_15] : memref<1x128xbf16, #tpu.memory_space<vmem>>, vector<1x128xbf16>
    %40 = arith.extf %39 : vector<1x128xbf16> to vector<1x128xf32>
    %41 = vector.broadcast %40 : vector<1x128xf32> to vector<8x128xf32>
    %42 = arith.addf %38, %41 : vector<8x128xf32>
    %cst_16 = arith.constant 0.000000e+00 : f32
    %43 = vector.broadcast %cst_16 : f32 to vector<8x128xf32>
    %44 = arith.maximumf %42, %43 : vector<8x128xf32>
    %45 = arith.truncf %44 : vector<8x128xf32> to vector<8x128xbf16>
    %c0_17 = arith.constant 0 : index
    %c0_18 = arith.constant 0 : index
    %46 = vector.load %arg6[%c0_17, %c0_18] : memref<128x128xbf16, #tpu.memory_space<vmem>>, vector<128x128xbf16>
    %cst_19 = arith.constant dense<0.000000e+00> : vector<8x128xf32>
    %47 = tpu.matmul %45, %46, %cst_19 {dimension_numbers = #tpu.dot_dimension_numbers<[1], [0], [0], [1], [0, 0, 1, 1], [], []>} : vector<8x128xbf16>, vector<128x128xbf16>, vector<8x128xf32> -> vector<8x128xf32>
    %c0_20 = arith.constant 0 : index
    %c0_21 = arith.constant 0 : index
    %48 = vector.load %arg7[%c0_20, %c0_21] : memref<1x128xbf16, #tpu.memory_space<vmem>>, vector<1x128xbf16>
    %49 = arith.extf %48 : vector<1x128xbf16> to vector<1x128xf32>
    %50 = vector.broadcast %49 : vector<1x128xf32> to vector<8x128xf32>
    %51 = arith.addf %47, %50 : vector<8x128xf32>
    %cst_22 = arith.constant 0.000000e+00 : f32
    %52 = vector.broadcast %cst_22 : f32 to vector<8x128xf32>
    %53 = arith.maximumf %51, %52 : vector<8x128xf32>
    %54 = arith.truncf %53 : vector<8x128xf32> to vector<8x128xbf16>
    %c0_23 = arith.constant 0 : index
    %c0_24 = arith.constant 0 : index
    %55 = vector.load %arg8[%c0_23, %c0_24] : memref<128x128xbf16, #tpu.memory_space<vmem>>, vector<128x128xbf16>
    %cst_25 = arith.constant dense<0.000000e+00> : vector<8x128xf32>
    %56 = tpu.matmul %54, %55, %cst_25 {dimension_numbers = #tpu.dot_dimension_numbers<[1], [0], [0], [1], [0, 0, 1, 1], [], []>} : vector<8x128xbf16>, vector<128x128xbf16>, vector<8x128xf32> -> vector<8x128xf32>
    %c0_26 = arith.constant 0 : index
    %c0_27 = arith.constant 0 : index
    %57 = vector.load %arg9[%c0_26, %c0_27] : memref<1x128xbf16, #tpu.memory_space<vmem>>, vector<1x128xbf16>
    %58 = arith.extf %57 : vector<1x128xbf16> to vector<1x128xf32>
    %59 = vector.broadcast %58 : vector<1x128xf32> to vector<8x128xf32>
    %60 = arith.addf %56, %59 : vector<8x128xf32>
    %c0_28 = arith.constant 0 : index
    %c0_29 = arith.constant 0 : index
    %61 = vector.load %arg10[%c0_28, %c0_29] : memref<1x128xf32, #tpu.memory_space<vmem>>, vector<1x128xf32>
    %c0_30 = arith.constant 0 : index
    %c0_31 = arith.constant 0 : index
    %62 = vector.load %arg11[%c0_30, %c0_31] : memref<1x128xf32, #tpu.memory_space<vmem>>, vector<1x128xf32>
    %63 = tpu.iota {dimensions = array<i32: 1>} : vector<1x128xi32>
    %c16_i32 = arith.constant 16 : i32
    %64 = vector.broadcast %c16_i32 : i32 to vector<1x128xi32>
    %65 = arith.cmpi slt, %63, %64 : vector<1x128xi32>
    %cst_32 = arith.constant 0.000000e+00 : f32
    %66 = vector.shape_cast %65 : vector<1x128xi1> to vector<1x128xi1>
    %67 = vector.broadcast %66 : vector<1x128xi1> to vector<8x128xi1>
    %68 = vector.broadcast %cst_32 : f32 to vector<8x128xf32>
    %69 = arith.select %67, %60, %68 : vector<8x128xi1>, vector<8x128xf32>
    %cst_33 = arith.constant dense<0.000000e+00> : vector<8xf32>
    %70 = vector.multi_reduction <add>, %69, %cst_33 [1] : vector<8x128xf32> to vector<8xf32>
    %71 = vector.shape_cast %70 : vector<8xf32> to vector<8x1xf32>
    %cst_34 = arith.constant 6.250000e-02 : f32
    %72 = vector.broadcast %cst_34 : f32 to vector<8x1xf32>
    %73 = arith.mulf %71, %72 : vector<8x1xf32>
    %74 = vector.broadcast %73 : vector<8x1xf32> to vector<8x128xf32>
    %75 = arith.subf %60, %74 : vector<8x128xf32>
    %cst_35 = arith.constant 0.000000e+00 : f32
    %76 = vector.shape_cast %65 : vector<1x128xi1> to vector<1x128xi1>
    %77 = vector.broadcast %76 : vector<1x128xi1> to vector<8x128xi1>
    %78 = vector.broadcast %cst_35 : f32 to vector<8x128xf32>
    %79 = arith.select %77, %75, %78 : vector<8x128xi1>, vector<8x128xf32>
    %80 = arith.mulf %79, %79 : vector<8x128xf32>
    %cst_36 = arith.constant dense<0.000000e+00> : vector<8xf32>
    %81 = vector.multi_reduction <add>, %80, %cst_36 [1] : vector<8x128xf32> to vector<8xf32>
    %82 = vector.shape_cast %81 : vector<8xf32> to vector<8x1xf32>
    %cst_37 = arith.constant 6.250000e-02 : f32
    %83 = vector.broadcast %cst_37 : f32 to vector<8x1xf32>
    %84 = arith.mulf %82, %83 : vector<8x1xf32>
    %85 = vector.broadcast %73 : vector<8x1xf32> to vector<8x128xf32>
    %86 = arith.subf %60, %85 : vector<8x128xf32>
    %cst_38 = arith.constant 9.99999974E-6 : f32
    %87 = vector.broadcast %cst_38 : f32 to vector<8x1xf32>
    %88 = arith.addf %84, %87 : vector<8x1xf32>
    %89 = math.rsqrt %88 : vector<8x1xf32>
    %90 = vector.broadcast %89 : vector<8x1xf32> to vector<8x128xf32>
    %91 = arith.mulf %86, %90 : vector<8x128xf32>
    %92 = vector.broadcast %61 : vector<1x128xf32> to vector<8x128xf32>
    %93 = arith.mulf %91, %92 : vector<8x128xf32>
    %94 = vector.broadcast %62 : vector<1x128xf32> to vector<8x128xf32>
    %95 = arith.addf %93, %94 : vector<8x128xf32>
    %c0_39 = arith.constant 0 : index
    %c0_40 = arith.constant 0 : index
    %96 = vector.load %arg12[%c0_39, %c0_40] : memref<8x128xf32, #tpu.memory_space<vmem>>, vector<8x128xf32>
    tpu.vector_store %arg12[%c0_39, %c0_40], %95 {strides = array<i32>} : memref<8x128xf32, #tpu.memory_space<vmem>>, vector<8x128xf32>,
    return
  }
  func.func @transform_0(%arg0: i32) -> (i32, i32) {
    %c0_i32 = arith.constant 0 : i32
    %c0_i32_0 = arith.constant 0 : i32
    return %arg0, %c0_i32 : i32, i32
  }
  func.func @transform_1(%arg0: i32) -> (i32, i32) {
    %c0_i32 = arith.constant 0 : i32
    %c0_i32_0 = arith.constant 0 : i32
    %c0_i32_1 = arith.constant 0 : i32
    return %c0_i32, %c0_i32_0 : i32, i32
  }
  func.func @transform_2(%arg0: i32) -> (i32, i32) {
    %c0_i32 = arith.constant 0 : i32
    %c0_i32_0 = arith.constant 0 : i32
    %c0_i32_1 = arith.constant 0 : i32
    return %c0_i32, %c0_i32_0 : i32, i32
  }
  func.func @transform_3(%arg0: i32) -> (i32, i32) {
    %c0_i32 = arith.constant 0 : i32
    %c0_i32_0 = arith.constant 0 : i32
    %c0_i32_1 = arith.constant 0 : i32
    return %c0_i32, %c0_i32_0 : i32, i32
  }
  func.func @transform_4(%arg0: i32) -> (i32, i32) {
    %c0_i32 = arith.constant 0 : i32
    %c0_i32_0 = arith.constant 0 : i32
    %c0_i32_1 = arith.constant 0 : i32
    return %c0_i32, %c0_i32_0 : i32, i32
  }
  func.func @transform_5(%arg0: i32) -> (i32, i32) {
    %c0_i32 = arith.constant 0 : i32
    %c0_i32_0 = arith.constant 0 : i32
    %c0_i32_1 = arith.constant 0 : i32
    return %c0_i32, %c0_i32_0 : i32, i32
  }
  func.func @transform_6(%arg0: i32) -> (i32, i32) {
    %c0_i32 = arith.constant 0 : i32
    %c0_i32_0 = arith.constant 0 : i32
    %c0_i32_1 = arith.constant 0 : i32
    return %c0_i32, %c0_i32_0 : i32, i32
  }
  func.func @transform_7(%arg0: i32) -> (i32, i32) {
    %c0_i32 = arith.constant 0 : i32
    %c0_i32_0 = arith.constant 0 : i32
    %c0_i32_1 = arith.constant 0 : i32
    return %c0_i32, %c0_i32_0 : i32, i32
  }
  func.func @transform_8(%arg0: i32) -> (i32, i32) {
    %c0_i32 = arith.constant 0 : i32
    %c0_i32_0 = arith.constant 0 : i32
    %c0_i32_1 = arith.constant 0 : i32
    return %c0_i32, %c0_i32_0 : i32, i32
  }
  func.func @transform_9(%arg0: i32) -> (i32, i32) {
    %c0_i32 = arith.constant 0 : i32
    %c0_i32_0 = arith.constant 0 : i32
    %c0_i32_1 = arith.constant 0 : i32
    return %c0_i32, %c0_i32_0 : i32, i32
  }
  func.func @transform_10(%arg0: i32) -> (i32, i32) {
    %c0_i32 = arith.constant 0 : i32
    %c0_i32_0 = arith.constant 0 : i32
    %c0_i32_1 = arith.constant 0 : i32
    return %c0_i32, %c0_i32_0 : i32, i32
  }
  func.func @transform_11(%arg0: i32) -> (i32, i32) {
    %c0_i32 = arith.constant 0 : i32
    %c0_i32_0 = arith.constant 0 : i32
    return %arg0, %c0_i32 : i32, i32
  }
}

</mosaic_0001>

<llo_original>
// kernel: tpu_custom_call.1
$region0: #{tpu_custom_call.1}
  #allocation0 [shape = 'u32[]', space=smem, size = 0x4, offset = 0x4, fixed_abs, tag = 'smem constant byte address 0x4 - core index']
  #allocation1 [shape = 'u32[72,128]{1,0:T(1,128)}', space=vmem, size = 0x9000, scoped, tag = 'internal scratch']
  %s0 = inlined_call_operand.hbm [shape: f32[8,128], index: 0, kind: input, shape index: {}]
  %s1 = inlined_call_operand.hbm [shape: f32[1,128], index: 1, kind: input, shape index: {}]
  %s2 = inlined_call_operand.vmem [shape: f32[1,128], index: 2, kind: input, shape index: {}]
  %s3 = inlined_call_operand.hbm [shape: bf16[128,128], index: 3, kind: input, shape index: {}]
  %s4 = inlined_call_operand.vmem [shape: bf16[1,128], index: 4, kind: input, shape index: {}]
  %s5 = inlined_call_operand.hbm [shape: bf16[128,128], index: 5, kind: input, shape index: {}]
  %s6 = inlined_call_operand.vmem [shape: bf16[1,128], index: 6, kind: input, shape index: {}]
  %s7 = inlined_call_operand.hbm [shape: bf16[128,128], index: 7, kind: input, shape index: {}]
  %s8 = inlined_call_operand.vmem [shape: bf16[1,128], index: 8, kind: input, shape index: {}]
  %s9 = inlined_call_operand.vmem [shape: f32[1,128], index: 9, kind: input, shape index: {}]
  %s10 = inlined_call_operand.vmem [shape: f32[1,128], index: 10, kind: input, shape index: {}]
  %s11 = inlined_call_operand.hbm [shape: f32[8,128], index: 11, kind: output, shape index: {}]
  %s12 = sld [smem:[#allocation0]]
  $region74: #{tpu_custom_call.1} parent=0
    _
  %s14 = ssub.s32 1, %s12
  %s15 = scalar_select 0, %s14, %s12
  $region1: #{tpu_custom_call.1} parent=0
    #allocation2 [shape = 'u8[4096]{0}', space=vmem, size = 0x1000, scoped, tag = 'input window, operand 0, single buffered']
    #allocation3 [shape = 's32[1]{0}', space=sflag, size = 0x4, scoped, tag = 'scoped memory for tpu_custom_call.1']
    #allocation4 [shape = 's32[1]{0}', space=sflag, size = 0x4, scoped, tag = 'scoped memory for tpu_custom_call.1']
    #allocation5 [shape = 'u8[512]{0}', space=vmem, size = 0x400, scoped, tag = 'input window, operand 1, single buffered']
    #allocation6 [shape = 's32[1]{0}', space=sflag, size = 0x4, scoped, tag = 'scoped memory for tpu_custom_call.1']
    #allocation7 [shape = 'u8[32768]{0}', space=vmem, size = 0x8000, scoped, tag = 'input window, operand 3, single buffered']
    #allocation8 [shape = 'u8[32768]{0}', space=vmem, size = 0x8000, scoped, tag = 'input window, operand 5, single buffered']
    #allocation9 [shape = 's32[1]{0}', space=sflag, size = 0x4, scoped, tag = 'scoped memory for tpu_custom_call.1']
    #allocation10 [shape = 'u8[32768]{0}', space=vmem, size = 0x8000, scoped, tag = 'input window, operand 7, single buffered']
    #allocation11 [shape = 'u8[4096]{0}', space=vmem, size = 0x1000, scoped, tag = 'output window, operand 0, single buffered']
    %16 = vsyncpa [#allocation3], 0
    %17 = vsyncpa [#allocation6], 0
    %18 = vsyncpa [#allocation9], 0
    %19 = vsyncpa [#allocation4], 0
    // Predicated region
    $region2: #{tpu_custom_call.1} parent=1 // pred_check
      _
    $region3: #{tpu_custom_call.1} parent=1 // pred_check_branch
      %21 = sbr.rel (0) target = $region5
    $region4: #{tpu_custom_call.1} parent=1 // pred_region
      %23 = vsyncadd [#allocation3], 0
      %s25 = sshll.u32 %s0, 4
      %s26 = int_to_ptr.hbm [resolvable:$true] %s25
      %s27 = sshll.u32 [#allocation2], 4
      %s28 = int_to_ptr.vmem [resolvable:$true] %s27
      %30 = dma.hbm_to_vmem [thread:$0]  %s26, 128, %s28, [#allocation3]
    $region5: #{tpu_custom_call.1} parent=1 // pred_fallthru
      _
    // Predicated region
    $region6: #{tpu_custom_call.1} parent=1 // pred_check
      _
    $region7: #{tpu_custom_call.1} parent=1 // pred_check_branch
      %32 = sbr.rel (0) target = $region9
    $region8: #{tpu_custom_call.1} parent=1 // pred_region
      %34 = vsyncadd [#allocation6], 0
      %s36 = sshll.u32 %s1, 4
      %s37 = int_to_ptr.hbm [resolvable:$true] %s36
      %s38 = sshll.u32 [#allocation5], 4
      %s39 = int_to_ptr.vmem [resolvable:$true] %s38
      %41 = dma.hbm_to_vmem [thread:$0]  %s37, 16, %s39, [#allocation6]
    $region9: #{tpu_custom_call.1} parent=1 // pred_fallthru
      _
    // Predicated region
    $region10: #{tpu_custom_call.1} parent=1 // pred_check
      _
    $region11: #{tpu_custom_call.1} parent=1 // pred_check_branch
      %43 = sbr.rel (0) target = $region13
    $region12: #{tpu_custom_call.1} parent=1 // pred_region
      _
    $region13: #{tpu_custom_call.1} parent=1 // pred_fallthru
      _
    // Predicated region
    $region14: #{tpu_custom_call.1} parent=1 // pred_check
      _
    $region15: #{tpu_custom_call.1} parent=1 // pred_check_branch
      %45 = sbr.rel (0) target = $region17
    $region16: #{tpu_custom_call.1} parent=1 // pred_region
      %47 = vsyncadd [#allocation6], 0
      %s48 = sshll.u32 %s3, 4
      %s49 = int_to_ptr.hbm [resolvable:$true] %s48
      %s50 = sshll.u32 [#allocation7], 4
      %s51 = int_to_ptr.vmem [resolvable:$true] %s50
      %56 = dma.hbm_to_vmem [thread:$0]  %s49, 1024, %s51, [#allocation6], 64, 64, 4
    $region17: #{tpu_custom_call.1} parent=1 // pred_fallthru
      _
    // Predicated region
    $region18: #{tpu_custom_call.1} parent=1 // pred_check
      _
    $region19: #{tpu_custom_call.1} parent=1 // pred_check_branch
      %58 = sbr.rel (0) target = $region21
    $region20: #{tpu_custom_call.1} parent=1 // pred_region
      _
    $region21: #{tpu_custom_call.1} parent=1 // pred_fallthru
      _
    // Predicated region
    $region22: #{tpu_custom_call.1} parent=1 // pred_check
      _
    $region23: #{tpu_custom_call.1} parent=1 // pred_check_branch
      %60 = sbr.rel (0) target = $region25
    $region24: #{tpu_custom_call.1} parent=1 // pred_region
      %62 = vsyncadd [#allocation9], 0
      %s63 = sshll.u32 %s5, 4
      %s64 = int_to_ptr.hbm [resolvable:$true] %s63
      %s65 = sshll.u32 [#allocation8], 4
      %s66 = int_to_ptr.vmem [resolvable:$true] %s65
      %71 = dma.hbm_to_vmem [thread:$0]  %s64, 1024, %s66, [#allocation9], 64, 64, 4
    $region25: #{tpu_custom_call.1} parent=1 // pred_fallthru
      _
    // Predicated region
    $region26: #{tpu_custom_call.1} parent=1 // pred_check
      _
    $region27: #{tpu_custom_call.1} parent=1 // pred_check_branch
      %73 = sbr.rel (0) target = $region29
    $region28: #{tpu_custom_call.1} parent=1 // pred_region
      _
    $region29: #{tpu_custom_call.1} parent=1 // pred_fallthru
      _
    // Predicated region
    $region30: #{tpu_custom_call.1} parent=1 // pred_check
      _
    $region31: #{tpu_custom_call.1} parent=1 // pred_check_branch
      %75 = sbr.rel (0) target = $region33
    $region32: #{tpu_custom_call.1} parent=1 // pred_region
      %77 = vsyncadd [#allocation9], 0
      %s78 = sshll.u32 %s7, 4
      %s79 = int_to_ptr.hbm [resolvable:$true] %s78
      %s80 = sshll.u32 [#allocation10], 4
      %s81 = int_to_ptr.vmem [resolvable:$true] %s80
      %86 = dma.hbm_to_vmem [thread:$0]  %s79, 1024, %s81, [#allocation9], 64, 64, 4
    $region33: #{tpu_custom_call.1} parent=1 // pred_fallthru
      _
    // Predicated region
    $region34: #{tpu_custom_call.1} parent=1 // pred_check
      _
    $region35: #{tpu_custom_call.1} parent=1 // pred_check_branch
      %88 = sbr.rel (0) target = $region37
    $region36: #{tpu_custom_call.1} parent=1 // pred_region
      _
    $region37: #{tpu_custom_call.1} parent=1 // pred_fallthru
      _
    // Predicated region
    $region38: #{tpu_custom_call.1} parent=1 // pred_check
      _
    $region39: #{tpu_custom_call.1} parent=1 // pred_check_branch
      %90 = sbr.rel (0) target = $region41
    $region40: #{tpu_custom_call.1} parent=1 // pred_region
      _
    $region41: #{tpu_custom_call.1} parent=1 // pred_fallthru
      _
    // Predicated region
    $region42: #{tpu_custom_call.1} parent=1 // pred_check
      _
    $region43: #{tpu_custom_call.1} parent=1 // pred_check_branch
      %92 = sbr.rel (0) target = $region45
    $region44: #{tpu_custom_call.1} parent=1 // pred_region
      _
    $region45: #{tpu_custom_call.1} parent=1 // pred_fallthru
      _
    // Predicated region
    $region46: #{tpu_custom_call.1} parent=1 // pred_check
      _
    $region47: #{tpu_custom_call.1} parent=1 // pred_check_branch
      %94 = sbr.rel (0) target = $region49
    $region48: #{tpu_custom_call.1} parent=1 // pred_region
      %96 = dma.done [#allocation3], 128
    $region49: #{tpu_custom_call.1} parent=1 // pred_fallthru
      _
    // Predicated region
    $region50: #{tpu_custom_call.1} parent=1 // pred_check
      _
    $region51: #{tpu_custom_call.1} parent=1 // pred_check_branch
      %98 = sbr.rel (0) target = $region53
    $region52: #{tpu_custom_call.1} parent=1 // pred_region
      %100 = dma.done [#allocation6], 16
    $region53: #{tpu_custom_call.1} parent=1 // pred_fallthru
      _
    // Predicated region
    $region54: #{tpu_custom_call.1} parent=1 // pred_check
      _
    $region55: #{tpu_custom_call.1} parent=1 // pred_check_branch
      %102 = sbr.rel (0) target = $region57
    $region56: #{tpu_custom_call.1} parent=1 // pred_region
      %104 = dma.done [#allocation6], 1024
    $region57: #{tpu_custom_call.1} parent=1 // pred_fallthru
      _
    // Predicated region
    $region58: #{tpu_custom_call.1} parent=1 // pred_check
      _
    $region59: #{tpu_custom_call.1} parent=1 // pred_check_branch
      %106 = sbr.rel (0) target = $region61
    $region60: #{tpu_custom_call.1} parent=1 // pred_region
      %108 = dma.done [#allocation9], 1024
    $region61: #{tpu_custom_call.1} parent=1 // pred_fallthru
      _
    // Predicated region
    $region62: #{tpu_custom_call.1} parent=1 // pred_check
      _
    $region63: #{tpu_custom_call.1} parent=1 // pred_check_branch
      %110 = sbr.rel (0) target = $region65
    $region64: #{tpu_custom_call.1} parent=1 // pred_region
      %112 = dma.done [#allocation9], 1024
    $region65: #{tpu_custom_call.1} parent=1 // pred_fallthru
      _
    %v113 = vld [vmem:[#allocation2] sm:$0xff]
    %v114 = vld [vmem:[#allocation5] sm:$0x1]
    %v115 = vld [vmem:[%s2] sm:$0x1]
    %v116 = vlaneseq
    %v117 = vand.u32 %v116, 127
    %vm118 = vcmp.lt.s32.totalorder %v117, 32
    %v119 = vsel %vm118, 1, 0
    %vm120 = vcmp.eq.s32.totalorder %v119, 1
    %v121 = vsel %vm120, %v113, 0.0
    %122 = vadd.xlane.f32.xlu0 %v121
    %v123 = vpop.xlane.xlu0 %122
    %v124 = vmul.f32 %v123, 0.03125
    %v125 = vsub.f32 %v113, %v124
    %v126 = vsel %vm120, %v125, 0.0
    %v127 = vmul.f32 %v126, %v126
    %128 = vadd.xlane.f32.xlu0 %v127
    %v129 = vpop.xlane.xlu0 %128
    %v130 = vmul.f32 %v129, 0.03125
    %v131 = vadd.f32 %v130, 1e-05
    %v132 = vrsqrt.pop %v131
    %v133 = vmul.f32 %v132, %v131
    %v134 = vmul.f32 %v133, %v132
    %v135 = vmul.f32 0.5, %v134
    %v136 = vsub.f32 1.5, %v135
    %v137 = vmul.f32 %v132, %v136
    %vm138 = vweird.f32 %v131
    %vm139 = vweird.f32 %v132
    %vm140 = vmor %vm138, %vm139
    %v141 = vsel %vm140, %v132, %v137
    %v142 = vmul.f32 %v125, %v141
    %v144 = vperm.slane %v114, 0
    %v146 = vmul.f32 %v142, %v144
    %v148 = vperm.slane %v115, 0
    %v150 = vadd.f32 %v146, %v148
    %v151 = vpack.c.bf16 %v150, %v150
    %v152 = vld [vmem:[#allocation7] sm:$0xf]
    %v153 = vld [vmem:[#allocation7 + $0x4] sm:$0xf]
    %v154 = vld [vmem:[#allocation7 + $0x8] sm:$0xf]
    %v155 = vld [vmem:[#allocation7 + $0xc] sm:$0xf]
    %v156 = vld [vmem:[#allocation7 + $0x10] sm:$0xf]
    %v157 = vld [vmem:[#allocation7 + $0x14] sm:$0xf]
    %v158 = vld [vmem:[#allocation7 + $0x18] sm:$0xf]
    %v159 = vld [vmem:[#allocation7 + $0x1c] sm:$0xf]
    %v160 = vld [vmem:[#allocation7 + $0x20] sm:$0xf]
    %v161 = vld [vmem:[#allocation7 + $0x24] sm:$0xf]
    %v162 = vld [vmem:[#allocation7 + $0x28] sm:$0xf]
    %v163 = vld [vmem:[#allocation7 + $0x2c] sm:$0xf]
    %v164 = vld [vmem:[#allocation7 + $0x30] sm:$0xf]
    %v165 = vld [vmem:[#allocation7 + $0x34] sm:$0xf]
    %v166 = vld [vmem:[#allocation7 + $0x38] sm:$0xf]
    %v167 = vld [vmem:[#allocation7 + $0x3c] sm:$0xf]
    %v168 = vld [vmem:[%s4] sm:$0x1]
    %v169 = vunpack.c.l.bf16 %v168
    %v170 = vperm.slane %v169, 0
    %v187 = vunpack.c.l.b16 %v152
    %v188 = vunpack.c.l.b16 %v153
    %v189 = vunpack.c.l.b16 %v154
    %v190 = vunpack.c.l.b16 %v155
    %v191 = vunpack.c.l.b16 %v156
    %v192 = vunpack.c.l.b16 %v157
    %v193 = vunpack.c.l.b16 %v158
    %v194 = vunpack.c.l.b16 %v159
    %v195 = vunpack.c.l.b16 %v160
    %v196 = vunpack.c.l.b16 %v161
    %v197 = vunpack.c.l.b16 %v162
    %v198 = vunpack.c.l.b16 %v163
    %v199 = vunpack.c.l.b16 %v164
    %v200 = vunpack.c.l.b16 %v165
    %v201 = vunpack.c.l.b16 %v166
    %v202 = vunpack.c.l.b16 %v167
    %v203 = vpack.c.b16 %v188, %v187
    %v204 = vpack.c.b16 %v190, %v189
    %v205 = vpack.c.b16 %v192, %v191
    %v206 = vpack.c.b16 %v194, %v193
    %v207 = vpack.c.b16 %v196, %v195
    %v208 = vpack.c.b16 %v198, %v197
    %v209 = vpack.c.b16 %v200, %v199
    %v210 = vpack.c.b16 %v202, %v201
    %219 = vmatpush.bf16.msra.mxu0 %v210
    %220 = vmatpush.bf16.msra.mxu0 %v209
    %221 = vmatpush.bf16.msra.mxu0 %v208
    %222 = vmatpush.bf16.msra.mxu0 %v207
    %223 = vmatpush.bf16.msra.mxu0 %v206
    %224 = vmatpush.bf16.msra.mxu0 %v205
    %225 = vmatpush.bf16.msra.mxu0 %v204
    %226 = vmatpush.bf16.msra.mxu0 %v203
    %227 = vmatmul.bf16.gmra.mxu0 %v151
    %v228 = vpop.f32.mrf.mxu0
    %v229 = vadd.f32 %v170, %v228
    %v230 = vpop.f32.mrf.mxu0
    %231 = vdwg.mxu0
    %v232 = vmax.f32 %v229, 0.0
    %v233 = vpack.c.bf16 %v232, %v232
    %v234 = vld [vmem:[#allocation8] sm:$0xf]
    %v235 = vld [vmem:[#allocation8 + $0x4] sm:$0xf]
    %v236 = vld [vmem:[#allocation8 + $0x8] sm:$0xf]
    %v237 = vld [vmem:[#allocation8 + $0xc] sm:$0xf]
    %v238 = vld [vmem:[#allocation8 + $0x10] sm:$0xf]
    %v239 = vld [vmem:[#allocation8 + $0x14] sm:$0xf]
    %v240 = vld [vmem:[#allocation8 + $0x18] sm:$0xf]
    %v241 = vld [vmem:[#allocation8 + $0x1c] sm:$0xf]
    %v242 = vld [vmem:[#allocation8 + $0x20] sm:$0xf]
    %v243 = vld [vmem:[#allocation8 + $0x24] sm:$0xf]
    %v244 = vld [vmem:[#allocation8 + $0x28] sm:$0xf]
    %v245 = vld [vmem:[#allocation8 + $0x2c] sm:$0xf]
    %v246 = vld [vmem:[#allocation8 + $0x30] sm:$0xf]
    %v247 = vld [vmem:[#allocation8 + $0x34] sm:$0xf]
    %v248 = vld [vmem:[#allocation8 + $0x38] sm:$0xf]
    %v249 = vld [vmem:[#allocation8 + $0x3c] sm:$0xf]
    %v250 = vld [vmem:[%s6] sm:$0x1]
    %v251 = vunpack.c.l.bf16 %v250
    %v252 = vperm.slane %v251, 0
    %v269 = vunpack.c.l.b16 %v234
    %v270 = vunpack.c.l.b16 %v235
    %v271 = vunpack.c.l.b16 %v236
    %v272 = vunpack.c.l.b16 %v237
    %v273 = vunpack.c.l.b16 %v238
    %v274 = vunpack.c.l.b16 %v239
    %v275 = vunpack.c.l.b16 %v240
    %v276 = vunpack.c.l.b16 %v241
    %v277 = vunpack.c.l.b16 %v242
    %v278 = vunpack.c.l.b16 %v243
    %v279 = vunpack.c.l.b16 %v244
    %v280 = vunpack.c.l.b16 %v245
    %v281 = vunpack.c.l.b16 %v246
    %v282 = vunpack.c.l.b16 %v247
    %v283 = vunpack.c.l.b16 %v248
    %v284 = vunpack.c.l.b16 %v249
    %v285 = vpack.c.b16 %v270, %v269
    %v286 = vpack.c.b16 %v272, %v271
    %v287 = vpack.c.b16 %v274, %v273
    %v288 = vpack.c.b16 %v276, %v275
    %v289 = vpack.c.b16 %v278, %v277
    %v290 = vpack.c.b16 %v280, %v279
    %v291 = vpack.c.b16 %v282, %v281
    %v292 = vpack.c.b16 %v284, %v283
    %301 = vmatpush.bf16.msra.mxu0 %v292
    %302 = vmatpush.bf16.msra.mxu0 %v291
    %303 = vmatpush.bf16.msra.mxu0 %v290
    %304 = vmatpush.bf16.msra.mxu0 %v289
    %305 = vmatpush.bf16.msra.mxu0 %v288
    %306 = vmatpush.bf16.msra.mxu0 %v287
    %307 = vmatpush.bf16.msra.mxu0 %v286
    %308 = vmatpush.bf16.msra.mxu0 %v285
    %309 = vmatmul.bf16.gmra.mxu0 %v233
    %v310 = vpop.f32.mrf.mxu0
    %v311 = vadd.f32 %v252, %v310
    %v312 = vpop.f32.mrf.mxu0
    %313 = vdwg.mxu0
    %v314 = vmax.f32 %v311, 0.0
    %v315 = vpack.c.bf16 %v314, %v314
    %v316 = vld [vmem:[#allocation10] sm:$0xf]
    %v317 = vld [vmem:[#allocation10 + $0x4] sm:$0xf]
    %v318 = vld [vmem:[#allocation10 + $0x8] sm:$0xf]
    %v319 = vld [vmem:[#allocation10 + $0xc] sm:$0xf]
    %v320 = vld [vmem:[#allocation10 + $0x10] sm:$0xf]
    %v321 = vld [vmem:[#allocation10 + $0x14] sm:$0xf]
    %v322 = vld [vmem:[#allocation10 + $0x18] sm:$0xf]
    %v323 = vld [vmem:[#allocation10 + $0x1c] sm:$0xf]
    %v324 = vld [vmem:[#allocation10 + $0x20] sm:$0xf]
    %v325 = vld [vmem:[#allocation10 + $0x24] sm:$0xf]
    %v326 = vld [vmem:[#allocation10 + $0x28] sm:$0xf]
    %v327 = vld [vmem:[#allocation10 + $0x2c] sm:$0xf]
    %v328 = vld [vmem:[#allocation10 + $0x30] sm:$0xf]
    %v329 = vld [vmem:[#allocation10 + $0x34] sm:$0xf]
    %v330 = vld [vmem:[#allocation10 + $0x38] sm:$0xf]
    %v331 = vld [vmem:[#allocation10 + $0x3c] sm:$0xf]
    %v332 = vld [vmem:[%s8] sm:$0x1]
    %v333 = vunpack.c.l.bf16 %v332
    %v334 = vperm.slane %v333, 0
    %v351 = vunpack.c.l.b16 %v316
    %v352 = vunpack.c.l.b16 %v317
    %v353 = vunpack.c.l.b16 %v318
    %v354 = vunpack.c.l.b16 %v319
    %v355 = vunpack.c.l.b16 %v320
    %v356 = vunpack.c.l.b16 %v321
    %v357 = vunpack.c.l.b16 %v322
    %v358 = vunpack.c.l.b16 %v323
    %v359 = vunpack.c.l.b16 %v324
    %v360 = vunpack.c.l.b16 %v325
    %v361 = vunpack.c.l.b16 %v326
    %v362 = vunpack.c.l.b16 %v327
    %v363 = vunpack.c.l.b16 %v328
    %v364 = vunpack.c.l.b16 %v329
    %v365 = vunpack.c.l.b16 %v330
    %v366 = vunpack.c.l.b16 %v331
    %v367 = vpack.c.b16 %v352, %v351
    %v368 = vpack.c.b16 %v354, %v353
    %v369 = vpack.c.b16 %v356, %v355
    %v370 = vpack.c.b16 %v358, %v357
    %v371 = vpack.c.b16 %v360, %v359
    %v372 = vpack.c.b16 %v362, %v361
    %v373 = vpack.c.b16 %v364, %v363
    %v374 = vpack.c.b16 %v366, %v365
    %383 = vmatpush.bf16.msra.mxu0 %v374
    %384 = vmatpush.bf16.msra.mxu0 %v373
    %385 = vmatpush.bf16.msra.mxu0 %v372
    %386 = vmatpush.bf16.msra.mxu0 %v371
    %387 = vmatpush.bf16.msra.mxu0 %v370
    %388 = vmatpush.bf16.msra.mxu0 %v369
    %389 = vmatpush.bf16.msra.mxu0 %v368
    %390 = vmatpush.bf16.msra.mxu0 %v367
    %391 = vmatmul.bf16.gmra.mxu0 %v315
    %v392 = vpop.f32.mrf.mxu0
    %v393 = vadd.f32 %v334, %v392
    %v394 = vpop.f32.mrf.mxu0
    %395 = vdwg.mxu0
    %v396 = vld [vmem:[%s9] sm:$0x1]
    %v397 = vld [vmem:[%s10] sm:$0x1]
    %vm398 = vcmp.lt.s32.totalorder %v117, 16
    %v399 = vsel %vm398, 1, 0
    %vm400 = vcmp.eq.s32.totalorder %v399, 1
    %v401 = vsel %vm400, %v393, 0.0
    %402 = vadd.xlane.f32.xlu0 %v401
    %v403 = vpop.xlane.xlu0 %402
    %v404 = vmul.f32 %v403, 0.0625
    %v405 = vsub.f32 %v393, %v404
    %v406 = vsel %vm400, %v405, 0.0
    %v407 = vmul.f32 %v406, %v406
    %408 = vadd.xlane.f32.xlu0 %v407
    %v409 = vpop.xlane.xlu0 %408
    %v410 = vmul.f32 %v409, 0.0625
    %v411 = vadd.f32 %v410, 1e-05
    %v412 = vrsqrt.pop %v411
    %v413 = vmul.f32 %v412, %v411
    %v414 = vmul.f32 %v413, %v412
    %v415 = vmul.f32 0.5, %v414
    %v416 = vsub.f32 1.5, %v415
    %v417 = vmul.f32 %v412, %v416
    %vm418 = vweird.f32 %v411
    %vm419 = vweird.f32 %v412
    %vm420 = vmor %vm418, %vm419
    %v421 = vsel %vm420, %v412, %v417
    %v422 = vmul.f32 %v405, %v421
    %v424 = vperm.slane %v396, 0
    %v426 = vmul.f32 %v422, %v424
    %v428 = vperm.slane %v397, 0
    %v430 = vadd.f32 %v426, %v428
    %431 = vst [vmem:[#allocation11] sm:$0xff] %v430
    // Predicated region
    $region66: #{tpu_custom_call.1} parent=1 // pred_check
      _
    $region67: #{tpu_custom_call.1} parent=1 // pred_check_branch
      %433 = sbr.rel (0) target = $region69
    $region68: #{tpu_custom_call.1} parent=1 // pred_region
      %435 = vsyncadd [#allocation4], 0
      %s437 = sshll.u32 [#allocation11], 4
      %s438 = int_to_ptr.vmem [resolvable:$true] %s437
      %s439 = sshll.u32 %s11, 4
      %s440 = int_to_ptr.hbm [resolvable:$true] %s439
      %442 = dma.vmem_to_hbm [thread:$0]  %s438, 128, %s440, [#allocation4]
    $region69: #{tpu_custom_call.1} parent=1 // pred_fallthru
      _
    // Predicated region
    $region70: #{tpu_custom_call.1} parent=1 // pred_check
      _
    $region71: #{tpu_custom_call.1} parent=1 // pred_check_branch
      %444 = sbr.rel (0) target = $region73
    $region72: #{tpu_custom_call.1} parent=1 // pred_region
      %446 = dma.done [#allocation4], 128
    $region73: #{tpu_custom_call.1} parent=1 // pred_fallthru
      _
    %447 = vsyncpa [#allocation3], 1
    %448 = vsyncpa [#allocation6], 1
    %449 = vsyncpa [#allocation9], 1
    %450 = vsyncpa [#allocation4], 1

</llo_original>
